<compile_context>
chip_gen: v7x
topology: tpu7x:2x2x1
jax: 0.10.0
libtpu: 0.0.40
codegen_flags: <defaults>
</compile_context>

<pallas_src>
import jax
import jax.numpy as jnp
from jax import lax
from jax.experimental import pallas as pl
from jax.experimental.pallas import tpu as pltpu


def _round_up(x, m):
    return (x + m - 1) // m * m


# ------------------------------------------------------------------ kernel 1
def input_proj_kernel(x_ref, wih_ref, b_ref, pre_ref):
    """pre = x @ W_ih (pre-transposed, gate-padded) + bias.  Parallel over rows."""
    pre_ref[...] = (
        jnp.dot(x_ref[...], wih_ref[...], preferred_element_type=jnp.float32)
        + b_ref[...]
    ).astype(pre_ref.dtype)


# ------------------------------------------------------------------ kernel 2
def lstm_recurrent_kernel(pre_ref, whh_ref, out_ref, h_scr, c_scr):
    """t_block timesteps of the recurrence per grid step (grid axis 0 = time)."""
    tb = pl.program_id(0)

    @pl.when(tb == 0)
    def _():
        # zero initial hidden / cell state (PyTorch default)
        h_scr[...] = jnp.zeros_like(h_scr)
        c_scr[...] = jnp.zeros_like(c_scr)

    hp = h_scr.shape[-1]          # padded hidden size (multiple of 128)
    t_block = pre_ref.shape[0]    # timesteps handled by this grid step

    def step(s, carry):
        h, c = carry
        # pre-gates already contain x@W_ih + bias; only the recurrent matmul left.
        gates = pre_ref[s] + jnp.dot(
            h, whh_ref[...], preferred_element_type=jnp.float32
        )                                             # (B, 4*Hp), order i|f|o|g
        sig = jax.nn.sigmoid(gates[:, : 3 * hp])      # one EUP pass over i|f|o slab
        i_g = sig[:, 0 * hp:1 * hp]
        f_g = sig[:, 1 * hp:2 * hp]
        o_g = sig[:, 2 * hp:3 * hp]
        g_g = jnp.tanh(gates[:, 3 * hp:4 * hp])
        c_new = f_g * c + i_g * g_g
        h_new = o_g * jnp.tanh(c_new)
        out_ref[s] = h_new.astype(out_ref.dtype)      # lane-dense (Hp=128) store
        return h_new, c_new

    h, c = lax.fori_loop(0, t_block, step, (h_scr[...], c_scr[...]), unroll=True)
    h_scr[...] = h
    c_scr[...] = c


# ------------------------------------------------------------------ wrapper
def decoder_forward(x, w_ih, w_hh, b_ih, b_hh, *, t_block=None):
    """x: (B, T, Hin) f32, PyTorch-layout LSTM params.  Returns (B, T, Hout)."""
    B, T, Hin = x.shape
    Hout = w_hh.shape[1]
    Hp = _round_up(Hout, 128)        # pad hidden to one full lane width
    four_hp = 4 * Hp

    # ---- parameter prep (done once, outside the kernels) --------------------
    # PyTorch gate order is (i, f, g, o); reorder to (i, f, o, g) so the three
    # sigmoid gates are contiguous, pad each gate block Hout -> Hp, transpose to
    # (K, 4*Hp) so gate matmuls are plain row-major `x @ W`.
    perm = jnp.array([0, 1, 3, 2])

    def prep_w(w):                   # (4*Hout, K) -> (K, 4*Hp)
        k = w.shape[1]
        w4 = w.reshape(4, Hout, k)[perm]
        w4 = jnp.pad(w4, ((0, 0), (0, Hp - Hout), (0, 0)))
        return jnp.transpose(w4.reshape(four_hp, k), (1, 0))

    wih_p = prep_w(w_ih)                                      # (Hin, 4*Hp)
    whh_p = jnp.pad(prep_w(w_hh), ((0, Hp - Hout), (0, 0)))   # (Hp, 4*Hp)
    bias4 = (b_ih + b_hh).reshape(4, Hout)[perm]
    bias_p = jnp.pad(bias4, ((0, 0), (0, Hp - Hout))).reshape(1, four_hp)

    # ---- stage 1: parallel input projection over all timesteps --------------
    x_tm = jnp.transpose(x, (1, 0, 2)).reshape(T * B, Hin)    # time-major rows
    rows = T * B
    r_block = 512 if (rows >= 512 and rows % 512 == 0) else rows

    pre2d = pl.pallas_call(
        input_proj_kernel,
        out_shape=jax.ShapeDtypeStruct((rows, four_hp), jnp.float32),
        grid_spec=pltpu.PrefetchScalarGridSpec(
            num_scalar_prefetch=0,
            grid=(rows // r_block,),
            in_specs=[
                pl.BlockSpec((r_block, Hin), lambda r: (r, 0)),
                pl.BlockSpec((Hin, four_hp), lambda r: (0, 0)),
                pl.BlockSpec((1, four_hp), lambda r: (0, 0)),
            ],
            out_specs=pl.BlockSpec((r_block, four_hp), lambda r: (r, 0)),
        ),
        compiler_params=pltpu.CompilerParams(
            dimension_semantics=("parallel",),
        ),
    )(x_tm, wih_p, bias_p)
    pre = pre2d.reshape(T, B, four_hp)

    # ---- stage 2: sequential recurrence, t_block timesteps per grid step ----
    if t_block is None:
        t_block = next(c for c in (16, 8, 4, 2, 1) if T % c == 0)
    assert T % t_block == 0, "t_block must divide T"

    out = pl.pallas_call(
        lstm_recurrent_kernel,
        out_shape=jax.ShapeDtypeStruct((T, B, Hp), x.dtype),
        grid_spec=pltpu.PrefetchScalarGridSpec(
            num_scalar_prefetch=0,
            grid=(T // t_block,),
            in_specs=[
                pl.BlockSpec((t_block, B, four_hp), lambda tb: (tb, 0, 0)),
                # W_hh is constant across the sequential time grid.
                # TODO(synk): at production sizes, single-buffer it
                # (pipeline_mode=pl.Buffered(1)) and cast to bf16 for v7x VMEM.
                pl.BlockSpec((Hp, four_hp), lambda tb: (0, 0)),
            ],
            out_specs=pl.BlockSpec((t_block, B, Hp), lambda tb: (tb, 0, 0)),
            scratch_shapes=[
                pltpu.VMEM((B, Hp), jnp.float32),   # h state (f32 across steps)
                pltpu.VMEM((B, Hp), jnp.float32),   # c state
            ],
        ),
        compiler_params=pltpu.CompilerParams(
            dimension_semantics=("arbitrary",),      # time steps are sequential
        ),
    )(pre, whh_p)

    # drop the lane padding, restore batch-major (B, T, Hout)
    return jnp.transpose(out[:, :, :Hout], (1, 0, 2))


# ------------------------------------------------------------------ reference
def decoder_reference(x, w_ih, w_hh, b_ih, b_hh):
    """Pure-JAX reference of PyTorch single-layer LSTM (batch_first)."""
    B, T, _ = x.shape
    Hout = w_hh.shape[1]
    bias = b_ih + b_hh

    def step(carry, x_t):
        h, c = carry
        gates = x_t @ w_ih.T + h @ w_hh.T + bias
        i = jax.nn.sigmoid(gates[:, 0 * Hout:1 * Hout])
        f = jax.nn.sigmoid(gates[:, 1 * Hout:2 * Hout])
        g = jnp.tanh(gates[:, 2 * Hout:3 * Hout])
        o = jax.nn.sigmoid(gates[:, 3 * Hout:4 * Hout])
        c = f * c + i * g
        h = o * jnp.tanh(c)
        return (h, c), h

    init = (jnp.zeros((B, Hout), jnp.float32), jnp.zeros((B, Hout), jnp.float32))
    _, ys = jax.lax.scan(step, init, jnp.transpose(x, (1, 0, 2)))
    return jnp.transpose(ys, (1, 0, 2))


if __name__ == "__main__":
    B, T = 2, 8
    hidden_size = 64      # LSTM input size (matches the module's hidden_size)
    output_size = 16      # LSTM hidden/output size

    key = jax.random.PRNGKey(0)
    kx, k1, k2, k3, k4 = jax.random.split(key, 5)
    scale = 1.0 / jnp.sqrt(output_size)

    x = jax.random.normal(kx, (B, T, hidden_size), dtype=jnp.float32)
    # PyTorch LSTM parameter shapes (gate order i, f, g, o):
    w_ih = jax.random.uniform(k1, (4 * output_size, hidden_size),
                              minval=-scale, maxval=scale, dtype=jnp.float32)
    w_hh = jax.random.uniform(k2, (4 * output_size, output_size),
                              minval=-scale, maxval=scale, dtype=jnp.float32)
    b_ih = jax.random.uniform(k3, (4 * output_size,),
                              minval=-scale, maxval=scale, dtype=jnp.float32)
    b_hh = jax.random.uniform(k4, (4 * output_size,),
                              minval=-scale, maxval=scale, dtype=jnp.float32)

    # t_block=4 -> grid=(2,) so the h/c carry across grid steps is exercised.
    out = decoder_forward(x, w_ih, w_hh, b_ih, b_hh, t_block=4)
    out = jax.block_until_ready(out)

    ref = decoder_reference(x, w_ih, w_hh, b_ih, b_hh)
    assert out.shape == (B, T, output_size)
    assert jnp.allclose(out, ref, atol=2e-5, rtol=2e-5), "mismatch vs reference"

    print("KERNEL_OK")
</pallas_src>

<mosaic_0001>
module attributes {stable_mosaic.version = 11 : i64} {
  func.func @input_proj_kernel(%arg0: i32, %arg1: memref<16x64xf32, #tpu.memory_space<vmem>>, %arg2: memref<64x512xf32, #tpu.memory_space<vmem>>, %arg3: memref<1x512xf32, #tpu.memory_space<vmem>>, %arg4: memref<16x512xf32, #tpu.memory_space<vmem>>) attributes {dimension_semantics = [#tpu.dimension_semantics<parallel>], iteration_bounds = array<i64: 1>, scalar_prefetch = 0 : i64, scratch_operands = 0 : i64, tpu.core_type = #tpu.core_type<tc>, window_params = [{transform_indices = @transform_0, window_bounds = array<i64: 16, 64>}, {pipeline_mode = #tpu.pipeline_mode<synchronous>, transform_indices = @transform_1, window_bounds = array<i64: 64, 512>}, {pipeline_mode = #tpu.pipeline_mode<synchronous>, transform_indices = @transform_2, window_bounds = array<i64: 1, 512>}, {transform_indices = @transform_3, window_bounds = array<i64: 16, 512>}]} {
    %c0 = arith.constant 0 : index
    %c0_0 = arith.constant 0 : index
    %0 = vector.load %arg1[%c0, %c0_0] : memref<16x64xf32, #tpu.memory_space<vmem>>, vector<16x64xf32>
    %c0_1 = arith.constant 0 : index
    %c0_2 = arith.constant 0 : index
    %1 = vector.load %arg2[%c0_1, %c0_2] : memref<64x512xf32, #tpu.memory_space<vmem>>, vector<64x512xf32>
    %cst = arith.constant dense<0.000000e+00> : vector<16x512xf32>
    %2 = tpu.matmul %0, %1, %cst {dimension_numbers = #tpu.dot_dimension_numbers<[1], [0], [0], [1], [0, 0, 1, 1], [], []>} : vector<16x64xf32>, vector<64x512xf32>, vector<16x512xf32> -> vector<16x512xf32>
    %c0_3 = arith.constant 0 : index
    %c0_4 = arith.constant 0 : index
    %3 = vector.load %arg3[%c0_3, %c0_4] : memref<1x512xf32, #tpu.memory_space<vmem>>, vector<1x512xf32>
    %4 = vector.broadcast %3 : vector<1x512xf32> to vector<16x512xf32>
    %5 = arith.addf %2, %4 : vector<16x512xf32>
    %c0_5 = arith.constant 0 : index
    %c0_6 = arith.constant 0 : index
    %6 = vector.load %arg4[%c0_5, %c0_6] : memref<16x512xf32, #tpu.memory_space<vmem>>, vector<16x512xf32>
    tpu.vector_store %arg4[%c0_5, %c0_6], %5 {strides = array<i32>} : memref<16x512xf32, #tpu.memory_space<vmem>>, vector<16x512xf32>,
    return
  }
  func.func @transform_0(%arg0: i32) -> (i32, i32) {
    %c0_i32 = arith.constant 0 : i32
    %c0_i32_0 = arith.constant 0 : i32
    return %arg0, %c0_i32 : i32, i32
  }
  func.func @transform_1(%arg0: i32) -> (i32, i32) {
    %c0_i32 = arith.constant 0 : i32
    %c0_i32_0 = arith.constant 0 : i32
    %c0_i32_1 = arith.constant 0 : i32
    return %c0_i32, %c0_i32_0 : i32, i32
  }
  func.func @transform_2(%arg0: i32) -> (i32, i32) {
    %c0_i32 = arith.constant 0 : i32
    %c0_i32_0 = arith.constant 0 : i32
    %c0_i32_1 = arith.constant 0 : i32
    return %c0_i32, %c0_i32_0 : i32, i32
  }
  func.func @transform_3(%arg0: i32) -> (i32, i32) {
    %c0_i32 = arith.constant 0 : i32
    %c0_i32_0 = arith.constant 0 : i32
    return %arg0, %c0_i32 : i32, i32
  }
}

</mosaic_0001>

<llo_original>
// kernel: tpu_custom_call.1
$region0: #{tpu_custom_call.1}
  #allocation0 [shape = 'u32[]', space=smem, size = 0x4, offset = 0x4, fixed_abs, tag = 'smem constant byte address 0x4 - core index']
  #allocation1 [shape = 'u32[144,128]{1,0:T(1,128)}', space=vmem, size = 0x12000, scoped, tag = 'internal scratch']
  %s0 = inlined_call_operand.hbm [shape: f32[16,64], index: 0, kind: input, shape index: {}]
  %s1 = inlined_call_operand.hbm [shape: f32[64,512], index: 1, kind: input, shape index: {}]
  %s2 = inlined_call_operand.vmem [shape: f32[1,512], index: 2, kind: input, shape index: {}]
  %s3 = inlined_call_operand.hbm [shape: f32[16,512], index: 3, kind: output, shape index: {}]
  %s4 = sld [smem:[#allocation0]]
  $region30: #{tpu_custom_call.1} parent=0
    _
  %s6 = ssub.s32 1, %s4
  %s7 = scalar_select 0, %s6, %s4
  $region1: #{tpu_custom_call.1} parent=0
    #allocation2 [shape = 'u8[8192]{0}', space=vmem, size = 0x2000, scoped, tag = 'input window, operand 0, single buffered']
    #allocation3 [shape = 's32[1]{0}', space=sflag, size = 0x4, scoped, tag = 'scoped memory for tpu_custom_call.1']
    #allocation4 [shape = 's32[1]{0}', space=sflag, size = 0x4, scoped, tag = 'scoped memory for tpu_custom_call.1']
    #allocation5 [shape = 'u8[131072]{0}', space=vmem, size = 0x20000, scoped, tag = 'input window, operand 1, single buffered']
    #allocation6 [shape = 's32[1]{0}', space=sflag, size = 0x4, scoped, tag = 'scoped memory for tpu_custom_call.1']
    #allocation7 [shape = 'u8[32768]{0}', space=vmem, size = 0x8000, scoped, tag = 'output window, operand 0, single buffered']
    %8 = vsyncpa [#allocation3], 0
    %9 = vsyncpa [#allocation6], 0
    %10 = vsyncpa [#allocation4], 0
    // Predicated region
    $region2: #{tpu_custom_call.1} parent=1 // pred_check
      _
    $region3: #{tpu_custom_call.1} parent=1 // pred_check_branch
      %12 = sbr.rel (0) target = $region5
    $region4: #{tpu_custom_call.1} parent=1 // pred_region
      %s14 = ssub.s32 256, 256
      %15 = vsyncadd [#allocation3], %s14
      %s16 = sshll.u32 [#allocation2], 4
      %s17 = int_to_ptr.vmem [resolvable:$true] %s16
      %22 = dma.hbm_to_vmem [thread:$0]  %s0, 256, %s17, [#allocation3], 128, 128, 8
    $region5: #{tpu_custom_call.1} parent=1 // pred_fallthru
      _
    // Predicated region
    $region6: #{tpu_custom_call.1} parent=1 // pred_check
      _
    $region7: #{tpu_custom_call.1} parent=1 // pred_check_branch
      %24 = sbr.rel (0) target = $region9
    $region8: #{tpu_custom_call.1} parent=1 // pred_region
      %s26 = ssub.s32 4096, 4096
      %27 = vsyncadd [#allocation6], %s26
      %s28 = sshll.u32 [#allocation5], 4
      %s29 = int_to_ptr.vmem [resolvable:$true] %s28
      %34 = dma.hbm_to_vmem [thread:$0]  %s1, 4096, %s29, [#allocation6], 512, 512, 32
    $region9: #{tpu_custom_call.1} parent=1 // pred_fallthru
      _
    // Predicated region
    $region10: #{tpu_custom_call.1} parent=1 // pred_check
      _
    $region11: #{tpu_custom_call.1} parent=1 // pred_check_branch
      %36 = sbr.rel (0) target = $region13
    $region12: #{tpu_custom_call.1} parent=1 // pred_region
      _
    $region13: #{tpu_custom_call.1} parent=1 // pred_fallthru
      _
    // Predicated region
    $region14: #{tpu_custom_call.1} parent=1 // pred_check
      _
    $region15: #{tpu_custom_call.1} parent=1 // pred_check_branch
      %38 = sbr.rel (0) target = $region17
    $region16: #{tpu_custom_call.1} parent=1 // pred_region
      %39 = dma.done [#allocation3], 256
    $region17: #{tpu_custom_call.1} parent=1 // pred_fallthru
      _
    // Predicated region
    $region18: #{tpu_custom_call.1} parent=1 // pred_check
      _
    $region19: #{tpu_custom_call.1} parent=1 // pred_check_branch
      %41 = sbr.rel (0) target = $region21
    $region20: #{tpu_custom_call.1} parent=1 // pred_region
      %42 = dma.done [#allocation6], 4096
    $region21: #{tpu_custom_call.1} parent=1 // pred_fallthru
      _
    %v43 = vld [vmem:[#allocation2] sm:$0xff]
    %v44 = vld [vmem:[#allocation2 + $0x8] sm:$0xff]
    %v45 = vld [vmem:[#allocation5] sm:$0xff]
    %v46 = vld [vmem:[#allocation5 + $0x8] sm:$0xff]
    %v47 = vld [vmem:[#allocation5 + $0x10] sm:$0xff]
    %v48 = vld [vmem:[#allocation5 + $0x18] sm:$0xff]
    %v49 = vld [vmem:[#allocation5 + $0x20] sm:$0xff]
    %v50 = vld [vmem:[#allocation5 + $0x28] sm:$0xff]
    %v51 = vld [vmem:[#allocation5 + $0x30] sm:$0xff]
    %v52 = vld [vmem:[#allocation5 + $0x38] sm:$0xff]
    %v53 = vld [vmem:[#allocation5 + $0x40] sm:$0xff]
    %v54 = vld [vmem:[#allocation5 + $0x48] sm:$0xff]
    %v55 = vld [vmem:[#allocation5 + $0x50] sm:$0xff]
    %v56 = vld [vmem:[#allocation5 + $0x58] sm:$0xff]
    %v57 = vld [vmem:[#allocation5 + $0x60] sm:$0xff]
    %v58 = vld [vmem:[#allocation5 + $0x68] sm:$0xff]
    %v59 = vld [vmem:[#allocation5 + $0x70] sm:$0xff]
    %v60 = vld [vmem:[#allocation5 + $0x78] sm:$0xff]
    %v61 = vld [vmem:[#allocation5 + $0x80] sm:$0xff]
    %v62 = vld [vmem:[#allocation5 + $0x88] sm:$0xff]
    %v63 = vld [vmem:[#allocation5 + $0x90] sm:$0xff]
    %v64 = vld [vmem:[#allocation5 + $0x98] sm:$0xff]
    %v65 = vld [vmem:[#allocation5 + $0xa0] sm:$0xff]
    %v66 = vld [vmem:[#allocation5 + $0xa8] sm:$0xff]
    %v67 = vld [vmem:[#allocation5 + $0xb0] sm:$0xff]
    %v68 = vld [vmem:[#allocation5 + $0xb8] sm:$0xff]
    %v69 = vld [vmem:[#allocation5 + $0xc0] sm:$0xff]
    %v70 = vld [vmem:[#allocation5 + $0xc8] sm:$0xff]
    %v71 = vld [vmem:[#allocation5 + $0xd0] sm:$0xff]
    %v72 = vld [vmem:[#allocation5 + $0xd8] sm:$0xff]
    %v73 = vld [vmem:[#allocation5 + $0xe0] sm:$0xff]
    %v74 = vld [vmem:[#allocation5 + $0xe8] sm:$0xff]
    %v75 = vld [vmem:[#allocation5 + $0xf0] sm:$0xff]
    %v76 = vld [vmem:[#allocation5 + $0xf8] sm:$0xff]
    %v77 = vld [vmem:[%s2] sm:$0xf]
    %v79 = vlaneseq
    %v80 = vshrl.u32 %v79, 7
    %v81 = vsub.s32 0, %v80
    %v82 = vrot.slane %v77, %v81
    %v83 = vlaneseq
    %v84 = vshrl.u32 %v83, 7
    %v85 = vsub.s32 1, %v84
    %v86 = vrot.slane %v77, %v85
    %v87 = vlaneseq
    %v88 = vshrl.u32 %v87, 7
    %v89 = vsub.s32 2, %v88
    %v90 = vrot.slane %v77, %v89
    %v91 = vlaneseq
    %v92 = vshrl.u32 %v91, 7
    %v93 = vsub.s32 3, %v92
    %v94 = vrot.slane %v77, %v93
    %vm99 = vcmask 523264
    %v101 = vsel %vm99, %v43, 0
    %v104 = vsel %vm99, %v44, 0
    %106 = vmatprep.subr.mxu0 %v46
    %107 = vmatpush1.msra.mxu0 %v45
    %108 = vmatprep.subr.mxu0 %v50
    %109 = vmatpush1.msra.mxu0 %v49
    %110 = vmatprep.subr.mxu0 %v54
    %111 = vmatpush1.msra.mxu0 %v53
    %112 = vmatprep.subr.mxu0 %v58
    %113 = vmatpush1.msra.mxu0 %v57
    %114 = vmatprep.subr.mxu0 %v62
    %115 = vmatpush1.msra.mxu0 %v61
    %116 = vmatprep.subr.mxu0 %v66
    %117 = vmatpush1.msra.mxu0 %v65
    %118 = vmatprep.subr.mxu0 %v70
    %119 = vmatpush1.msra.mxu0 %v69
    %120 = vmatprep.subr.mxu0 %v74
    %121 = vmatpush1.msra.mxu0 %v73
    %122 = vmatprep.subr.mxu0 0.0
    %123 = vmatpush1.msra.mxu0 0.0
    %124 = vmatprep.subr.mxu0 0.0
    %125 = vmatpush1.msra.mxu0 0.0
    %126 = vmatprep.subr.mxu0 0.0
    %127 = vmatpush1.msra.mxu0 0.0
    %128 = vmatprep.subr.mxu0 0.0
    %129 = vmatpush1.msra.mxu0 0.0
    %130 = vmatprep.subr.mxu0 0.0
    %131 = vmatpush1.msra.mxu0 0.0
    %132 = vmatprep.subr.mxu0 0.0
    %133 = vmatpush1.msra.mxu0 0.0
    %134 = vmatprep.subr.mxu0 0.0
    %135 = vmatpush1.msra.mxu0 0.0
    %136 = vmatprep.subr.mxu0 0.0
    %137 = vmatpush1.msra.mxu0 0.0
    %138 = vmatprep.subr.mxu0 0.0
    %139 = vmatpush1.msra.mxu0 0.0
    %140 = vmatprep.subr.mxu0 0.0
    %141 = vmatpush1.msra.mxu0 0.0
    %142 = vmatprep.subr.mxu0 0.0
    %143 = vmatpush1.msra.mxu0 0.0
    %144 = vmatprep.subr.mxu0 0.0
    %145 = vmatpush1.msra.mxu0 0.0
    %146 = vmatprep.subr.mxu0 0.0
    %147 = vmatpush1.msra.mxu0 0.0
    %148 = vmatprep.subr.mxu0 0.0
    %149 = vmatpush1.msra.mxu0 0.0
    %150 = vmatprep.subr.mxu0 0.0
    %151 = vmatpush1.msra.mxu0 0.0
    %152 = vmatprep.subr.mxu0 0.0
    %153 = vmatpush1.msra.mxu0 0.0
    %154 = vmatprep.subr.mxu0 0.0
    %155 = vmatpush1.msra.mxu0 0.0
    %156 = vmatprep.subr.mxu0 0.0
    %157 = vmatpush1.msra.mxu0 0.0
    %158 = vmatprep.subr.mxu0 0.0
    %159 = vmatpush1.msra.mxu0 0.0
    %160 = vmatprep.subr.mxu0 0.0
    %161 = vmatpush1.msra.mxu0 0.0
    %162 = vmatprep.subr.mxu0 0.0
    %163 = vmatpush1.msra.mxu0 0.0
    %164 = vmatprep.subr.mxu0 0.0
    %165 = vmatpush1.msra.mxu0 0.0
    %166 = vmatprep.subr.mxu0 0.0
    %167 = vmatpush1.msra.mxu0 0.0
    %168 = vmatprep.subr.mxu0 0.0
    %169 = vmatpush1.msra.mxu0 0.0
    %170 = vmatprep.mubr.f32.mxu0 0.0
    %171 = vmatmul.mubr.f32.gmra.mrb[0].mxu0 %v101
    %v172 = vpop.f32.mrb[0].mxu0
    %v173 = vadd.f32 %v82, %v172
    %v174 = vpop.f32.mrb[0].mxu0
    %v175 = vadd.f32 %v86, %v174
    %176 = vmatprep.mubr.f32.mxu0 0.0
    %177 = vmatmul.mubr.f32.gmra.mrb[0].mxu0 %v104
    %v178 = vpop.f32.mrb[0].mxu0
    %v179 = vadd.f32 %v82, %v178
    %v180 = vpop.f32.mrb[0].mxu0
    %v181 = vadd.f32 %v86, %v180
    %182 = vdwg.mxu0
    %183 = vmatprep.subr.mxu0 %v48
    %184 = vmatpush1.msra.mxu0 %v47
    %185 = vmatprep.subr.mxu0 %v52
    %186 = vmatpush1.msra.mxu0 %v51
    %187 = vmatprep.subr.mxu0 %v56
    %188 = vmatpush1.msra.mxu0 %v55
    %189 = vmatprep.subr.mxu0 %v60
    %190 = vmatpush1.msra.mxu0 %v59
    %191 = vmatprep.subr.mxu0 %v64
    %192 = vmatpush1.msra.mxu0 %v63
    %193 = vmatprep.subr.mxu0 %v68
    %194 = vmatpush1.msra.mxu0 %v67
    %195 = vmatprep.subr.mxu0 %v72
    %196 = vmatpush1.msra.mxu0 %v71
    %197 = vmatprep.subr.mxu0 %v76
    %198 = vmatpush1.msra.mxu0 %v75
    %199 = vmatprep.subr.mxu0 0.0
    %200 = vmatpush1.msra.mxu0 0.0
    %201 = vmatprep.subr.mxu0 0.0
    %202 = vmatpush1.msra.mxu0 0.0
    %203 = vmatprep.subr.mxu0 0.0
    %204 = vmatpush1.msra.mxu0 0.0
    %205 = vmatprep.subr.mxu0 0.0
    %206 = vmatpush1.msra.mxu0 0.0
    %207 = vmatprep.subr.mxu0 0.0
    %208 = vmatpush1.msra.mxu0 0.0
    %209 = vmatprep.subr.mxu0 0.0
    %210 = vmatpush1.msra.mxu0 0.0
    %211 = vmatprep.subr.mxu0 0.0
    %212 = vmatpush1.msra.mxu0 0.0
    %213 = vmatprep.subr.mxu0 0.0
    %214 = vmatpush1.msra.mxu0 0.0
    %215 = vmatprep.subr.mxu0 0.0
    %216 = vmatpush1.msra.mxu0 0.0
    %217 = vmatprep.subr.mxu0 0.0
    %218 = vmatpush1.msra.mxu0 0.0
    %219 = vmatprep.subr.mxu0 0.0
    %220 = vmatpush1.msra.mxu0 0.0
    %221 = vmatprep.subr.mxu0 0.0
    %222 = vmatpush1.msra.mxu0 0.0
    %223 = vmatprep.subr.mxu0 0.0
    %224 = vmatpush1.msra.mxu0 0.0
    %225 = vmatprep.subr.mxu0 0.0
    %226 = vmatpush1.msra.mxu0 0.0
    %227 = vmatprep.subr.mxu0 0.0
    %228 = vmatpush1.msra.mxu0 0.0
    %229 = vmatprep.subr.mxu0 0.0
    %230 = vmatpush1.msra.mxu0 0.0
    %231 = vmatprep.subr.mxu0 0.0
    %232 = vmatpush1.msra.mxu0 0.0
    %233 = vmatprep.subr.mxu0 0.0
    %234 = vmatpush1.msra.mxu0 0.0
    %235 = vmatprep.subr.mxu0 0.0
    %236 = vmatpush1.msra.mxu0 0.0
    %237 = vmatprep.subr.mxu0 0.0
    %238 = vmatpush1.msra.mxu0 0.0
    %239 = vmatprep.subr.mxu0 0.0
    %240 = vmatpush1.msra.mxu0 0.0
    %241 = vmatprep.subr.mxu0 0.0
    %242 = vmatpush1.msra.mxu0 0.0
    %243 = vmatprep.subr.mxu0 0.0
    %244 = vmatpush1.msra.mxu0 0.0
    %245 = vmatprep.subr.mxu0 0.0
    %246 = vmatpush1.msra.mxu0 0.0
    %247 = vmatprep.mubr.f32.mxu0 0.0
    %248 = vmatmul.mubr.f32.gmra.mrb[0].mxu0 %v101
    %v249 = vpop.f32.mrb[0].mxu0
    %v250 = vadd.f32 %v90, %v249
    %v251 = vpop.f32.mrb[0].mxu0
    %v252 = vadd.f32 %v94, %v251
    %253 = vmatprep.mubr.f32.mxu0 0.0
    %254 = vmatmul.mubr.f32.gmra.mrb[0].mxu0 %v104
    %v255 = vpop.f32.mrb[0].mxu0
    %v256 = vadd.f32 %v90, %v255
    %v257 = vpop.f32.mrb[0].mxu0
    %v258 = vadd.f32 %v94, %v257
    %259 = vdwg.mxu0
    %260 = vst [vmem:[#allocation7] sm:$0xff] %v173
    %261 = vst [vmem:[#allocation7 + $0x8] sm:$0xff] %v175
    %262 = vst [vmem:[#allocation7 + $0x10] sm:$0xff] %v250
    %263 = vst [vmem:[#allocation7 + $0x18] sm:$0xff] %v252
    %264 = vst [vmem:[#allocation7 + $0x20] sm:$0xff] %v179
    %265 = vst [vmem:[#allocation7 + $0x28] sm:$0xff] %v181
    %266 = vst [vmem:[#allocation7 + $0x30] sm:$0xff] %v256
    %267 = vst [vmem:[#allocation7 + $0x38] sm:$0xff] %v258
    // Predicated region
    $region22: #{tpu_custom_call.1} parent=1 // pred_check
      _
    $region23: #{tpu_custom_call.1} parent=1 // pred_check_branch
      %269 = sbr.rel (0) target = $region25
    $region24: #{tpu_custom_call.1} parent=1 // pred_region
      %s271 = ssub.s32 1024, 1024
      %272 = vsyncadd [#allocation4], %s271
      %s273 = sshll.u32 [#allocation7], 4
      %s274 = int_to_ptr.vmem [resolvable:$true] %s273
      %279 = dma.vmem_to_hbm [thread:$0]  %s274, 1024, %s3, [#allocation4], 512, 512, 32
    $region25: #{tpu_custom_call.1} parent=1 // pred_fallthru
      _
    // Predicated region
    $region26: #{tpu_custom_call.1} parent=1 // pred_check
      _
    $region27: #{tpu_custom_call.1} parent=1 // pred_check_branch
      %281 = sbr.rel (0) target = $region29
    $region28: #{tpu_custom_call.1} parent=1 // pred_region
      %282 = dma.done [#allocation4], 1024
    $region29: #{tpu_custom_call.1} parent=1 // pred_fallthru
      _
    %283 = vsyncpa [#allocation3], 1
    %284 = vsyncpa [#allocation6], 1
    %285 = vsyncpa [#allocation4], 1

</llo_original>
